<compile_context>
chip_gen: v5e
topology: v5e:2x2
jax: 0.10.0
libtpu: 0.0.40
codegen_flags: <defaults>
</compile_context>

<pallas_src>
import functools

import jax
import jax.numpy as jnp
from jax.experimental import pallas as pl
from jax.experimental.pallas import tpu as pltpu

EPS = 1e-07


def _epilogue(p, d, negative_slope, approx_recip):
    # p, d: [3, tn, C_out] float32
    dot = jnp.sum(p * d, axis=0, keepdims=True)        # [1, tn, C_out]
    dns = jnp.sum(d * d, axis=0, keepdims=True)        # [1, tn, C_out]
    if approx_recip:
        inv = pl.reciprocal(dns + EPS, approx=True)    # EUP slot (approximate)
    else:
        inv = 1.0 / (dns + EPS)                        # exact (matches reference)
    proj = p - (dot * inv) * d                         # projection onto plane orthogonal to d
    if negative_slope == 0.0:
        return jnp.where(dot >= 0.0, p, proj)
    ns = jnp.float32(negative_slope)
    return jnp.where(dot >= 0.0, p, ns * p + (1.0 - ns) * proj)


def _vn_kernel_fused(x_ref, w_ref, o_ref, *, c_out, negative_slope, approx_recip):
    # x_ref: [3, tn, C_in], w_ref: [C_in, 2*C_out], o_ref: [3, tn, C_out]
    three, tn, c_in = x_ref.shape
    x2d = x_ref[...].astype(jnp.float32).reshape(three * tn, c_in)
    pd = jnp.dot(x2d, w_ref[...].astype(jnp.float32),
                 preferred_element_type=jnp.float32)            # [3*tn, 2*C_out]
    pd = pd.reshape(three, tn, 2 * c_out)
    p = pd[:, :, :c_out]      # lane-tile aligned slice (c_out % 128 == 0)
    d = pd[:, :, c_out:]
    o_ref[...] = _epilogue(p, d, negative_slope, approx_recip).astype(o_ref.dtype)


def _vn_kernel_split(x_ref, wf_ref, wd_ref, o_ref, *, negative_slope, approx_recip):
    # x_ref: [3, tn, C_in], wf/wd: [C_in, C_out], o_ref: [3, tn, C_out]
    three, tn, c_in = x_ref.shape
    c_out = o_ref.shape[-1]
    x2d = x_ref[...].astype(jnp.float32).reshape(three * tn, c_in)
    p = jnp.dot(x2d, wf_ref[...].astype(jnp.float32),
                preferred_element_type=jnp.float32).reshape(three, tn, c_out)
    d = jnp.dot(x2d, wd_ref[...].astype(jnp.float32),
                preferred_element_type=jnp.float32).reshape(three, tn, c_out)
    o_ref[...] = _epilogue(p, d, negative_slope, approx_recip).astype(o_ref.dtype)


def _round_up(v, m):
    return ((v + m - 1) // m) * m


def _choose_tn(c_in, c_out, w_cols, itemsize=4, budget_bytes=24 * 1024 * 1024):
    # Rough per-step VMEM: double-buffered x and out blocks + weight block(s).
    # Budget kept at ~24 MiB so the same tile fits v5e/v6e (128 MiB) and v7x (64 MiB) VMEM.
    w_bytes = 2 * c_in * w_cols * itemsize
    per_row = 2 * 3 * (c_in + c_out) * itemsize
    tn = (budget_bytes - w_bytes) // max(per_row, 1)
    tn = int(max(8, min(1024, tn)))
    tn -= tn % 8
    return max(8, tn)


def vn_linear_leakyrelu_k(xk, w_feat, w_dir, *, negative_slope=0.0, tn=None,
                          approx_recip=False):
    """xk: [3, N, C_in] (persistent kernel layout). Returns [3, N, C_out]."""
    three, n, c_in = xk.shape
    assert three == 3
    c_out = w_feat.shape[0]
    fuse = (c_out % 128 == 0)          # lane-aligned split of the fused matmul output
    w_cols = 2 * c_out if fuse else c_out

    if tn is None:
        tn = _choose_tn(c_in, c_out, w_cols)
    tn = min(tn, _round_up(n, 8))
    tn = max(8, tn - (tn % 8))
    n_pad = _round_up(n, tn)
    if n_pad != n:
        xk = jnp.pad(xk, ((0, 0), (0, n_pad - n), (0, 0)))  # zero rows -> zero outputs

    grid = (n_pad // tn,)
    x_spec = pl.BlockSpec((3, tn, c_in), lambda i: (0, i, 0))
    o_spec = pl.BlockSpec((3, tn, c_out), lambda i: (0, i, 0))
    cparams = pltpu.CompilerParams(
        dimension_semantics=("parallel",),
        vmem_limit_bytes=48 * 1024 * 1024,
    )

    if fuse:
        w = jnp.concatenate([jnp.transpose(w_feat), jnp.transpose(w_dir)], axis=1)  # [C_in, 2*C_out]
        kernel = functools.partial(_vn_kernel_fused, c_out=c_out,
                                   negative_slope=negative_slope,
                                   approx_recip=approx_recip)
        out_k = pl.pallas_call(
            kernel,
            out_shape=jax.ShapeDtypeStruct((3, n_pad, c_out), xk.dtype),
            grid_spec=pltpu.PrefetchScalarGridSpec(
                num_scalar_prefetch=0,
                grid=grid,
                in_specs=[x_spec,
                          pl.BlockSpec((c_in, 2 * c_out), lambda i: (0, 0))],
                out_specs=o_spec),
            compiler_params=cparams,
        )(xk, w)
    else:
        kernel = functools.partial(_vn_kernel_split,
                                   negative_slope=negative_slope,
                                   approx_recip=approx_recip)
        out_k = pl.pallas_call(
            kernel,
            out_shape=jax.ShapeDtypeStruct((3, n_pad, c_out), xk.dtype),
            grid_spec=pltpu.PrefetchScalarGridSpec(
                num_scalar_prefetch=0,
                grid=grid,
                in_specs=[x_spec,
                          pl.BlockSpec((c_in, c_out), lambda i: (0, 0)),
                          pl.BlockSpec((c_in, c_out), lambda i: (0, 0))],
                out_specs=o_spec),
            compiler_params=cparams,
        )(xk, jnp.transpose(w_feat), jnp.transpose(w_dir))

    if n_pad != n:
        out_k = out_k[:, :n, :]
    return out_k


def vn_linear_leakyrelu(x, w_feat, w_dir, *, negative_slope=0.0, tn=None,
                        approx_recip=False):
    """Convenience wrapper matching the PyTorch layout.

    x: [N, C_in, 3], w_feat/w_dir: [C_out, C_in] (nn.Linear weight layout).
    Returns [N, C_out, 3].
    """
    xk = jnp.transpose(x, (2, 0, 1))                       # [3, N, C_in]
    out_k = vn_linear_leakyrelu_k(xk, w_feat, w_dir,
                                  negative_slope=negative_slope, tn=tn,
                                  approx_recip=approx_recip)
    return jnp.transpose(out_k, (1, 2, 0))                 # [N, C_out, 3]


def _reference(x, w_feat, w_dir, negative_slope=0.0):
    # Pure-JAX mirror of the PyTorch forward, for correctness checking.
    p = jnp.einsum("oc,nck->nok", w_feat, x)
    d = jnp.einsum("oc,nck->nok", w_dir, x)
    dot = jnp.sum(p * d, axis=2, keepdims=True)
    dns = jnp.sum(d * d, axis=2, keepdims=True)
    mask = (dot >= 0.0).astype(x.dtype)
    ns = negative_slope
    return ns * p + (1.0 - ns) * (mask * p + (1.0 - mask) * (p - dot / (dns + EPS) * d))


if __name__ == "__main__":
    key = jax.random.PRNGKey(0)
    k1, k2, k3, k4, k5, k6 = jax.random.split(key, 6)

    # Case 1: module-default config (negative_slope=0), small C_out -> split-weights path.
    n1, ci1, co1 = 16, 8, 16
    x1 = jax.random.normal(k1, (n1, ci1, 3), dtype=jnp.float32)
    b1 = 1.0 / (ci1 ** 0.5)
    wf1 = jax.random.uniform(k2, (co1, ci1), minval=-b1, maxval=b1, dtype=jnp.float32)
    wd1 = jax.random.uniform(k3, (co1, ci1), minval=-b1, maxval=b1, dtype=jnp.float32)
    out1 = jax.block_until_ready(vn_linear_leakyrelu(x1, wf1, wd1, negative_slope=0.0))
    ref1 = _reference(x1, wf1, wd1, 0.0)
    assert out1.shape == (n1, co1, 3), out1.shape
    assert jnp.allclose(out1, ref1, atol=1e-5, rtol=1e-5), "case 1 mismatch vs reference"

    # Case 2: lane-aligned C_out -> fused single-matmul path, nonzero negative_slope.
    n2, ci2, co2 = 256, 32, 128
    x2 = jax.random.normal(k4, (n2, ci2, 3), dtype=jnp.float32)
    b2 = 1.0 / (ci2 ** 0.5)
    wf2 = jax.random.uniform(k5, (co2, ci2), minval=-b2, maxval=b2, dtype=jnp.float32)
    wd2 = jax.random.uniform(k6, (co2, ci2), minval=-b2, maxval=b2, dtype=jnp.float32)
    out2 = jax.block_until_ready(vn_linear_leakyrelu(x2, wf2, wd2, negative_slope=0.2))
    ref2 = _reference(x2, wf2, wd2, 0.2)
    assert out2.shape == (n2, co2, 3), out2.shape
    assert jnp.allclose(out2, ref2, atol=1e-4, rtol=1e-4), "case 2 mismatch vs reference"

    print("KERNEL_OK")
</pallas_src>

<mosaic_0001>
module attributes {stable_mosaic.version = 11 : i64} {
  func.func @_vn_kernel_split(%arg0: i32, %arg1: memref<3x16x8xf32, #tpu.memory_space<vmem>>, %arg2: memref<8x16xf32, #tpu.memory_space<vmem>>, %arg3: memref<8x16xf32, #tpu.memory_space<vmem>>, %arg4: memref<3x16x16xf32, #tpu.memory_space<vmem>>) attributes {dimension_semantics = [#tpu.dimension_semantics<parallel>], iteration_bounds = array<i64: 1>, scalar_prefetch = 0 : i64, scratch_operands = 0 : i64, tpu.core_type = #tpu.core_type<tc>, window_params = [{transform_indices = @transform_0, window_bounds = array<i64: 3, 16, 8>}, {pipeline_mode = #tpu.pipeline_mode<synchronous>, transform_indices = @transform_1, window_bounds = array<i64: 8, 16>}, {pipeline_mode = #tpu.pipeline_mode<synchronous>, transform_indices = @transform_2, window_bounds = array<i64: 8, 16>}, {transform_indices = @transform_3, window_bounds = array<i64: 3, 16, 16>}]} {
    %c0 = arith.constant 0 : index
    %c0_0 = arith.constant 0 : index
    %c0_1 = arith.constant 0 : index
    %0 = vector.load %arg1[%c0, %c0_0, %c0_1] : memref<3x16x8xf32, #tpu.memory_space<vmem>>, vector<3x16x8xf32>
    %1 = vector.shape_cast %0 : vector<3x16x8xf32> to vector<48x8xf32>
    %c0_2 = arith.constant 0 : index
    %c0_3 = arith.constant 0 : index
    %2 = vector.load %arg2[%c0_2, %c0_3] : memref<8x16xf32, #tpu.memory_space<vmem>>, vector<8x16xf32>
    %cst = arith.constant dense<0.000000e+00> : vector<48x16xf32>
    %3 = tpu.matmul %1, %2, %cst {dimension_numbers = #tpu.dot_dimension_numbers<[1], [0], [0], [1], [0, 0, 1, 1], [], []>} : vector<48x8xf32>, vector<8x16xf32>, vector<48x16xf32> -> vector<48x16xf32>
    %4 = vector.shape_cast %3 : vector<48x16xf32> to vector<3x16x16xf32>
    %c0_4 = arith.constant 0 : index
    %c0_5 = arith.constant 0 : index
    %5 = vector.load %arg3[%c0_4, %c0_5] : memref<8x16xf32, #tpu.memory_space<vmem>>, vector<8x16xf32>
    %cst_6 = arith.constant dense<0.000000e+00> : vector<48x16xf32>
    %6 = tpu.matmul %1, %5, %cst_6 {dimension_numbers = #tpu.dot_dimension_numbers<[1], [0], [0], [1], [0, 0, 1, 1], [], []>} : vector<48x8xf32>, vector<8x16xf32>, vector<48x16xf32> -> vector<48x16xf32>
    %7 = vector.shape_cast %6 : vector<48x16xf32> to vector<3x16x16xf32>
    %8 = arith.mulf %4, %7 : vector<3x16x16xf32>
    %cst_7 = arith.constant dense<0.000000e+00> : vector<16x16xf32>
    %9 = vector.multi_reduction <add>, %8, %cst_7 [0] : vector<3x16x16xf32> to vector<16x16xf32>
    %10 = vector.shape_cast %9 : vector<16x16xf32> to vector<1x16x16xf32>
    %11 = arith.mulf %7, %7 : vector<3x16x16xf32>
    %cst_8 = arith.constant dense<0.000000e+00> : vector<16x16xf32>
    %12 = vector.multi_reduction <add>, %11, %cst_8 [0] : vector<3x16x16xf32> to vector<16x16xf32>
    %13 = vector.shape_cast %12 : vector<16x16xf32> to vector<1x16x16xf32>
    %cst_9 = arith.constant 1.000000e-07 : f32
    %14 = vector.broadcast %cst_9 : f32 to vector<1x16x16xf32>
    %15 = arith.addf %13, %14 : vector<1x16x16xf32>
    %cst_10 = arith.constant 1.000000e+00 : f32
    %16 = vector.broadcast %cst_10 : f32 to vector<1x16x16xf32>
    %17 = arith.divf %16, %15 : vector<1x16x16xf32>
    %18 = arith.mulf %10, %17 : vector<1x16x16xf32>
    %19 = vector.broadcast %18 : vector<1x16x16xf32> to vector<3x16x16xf32>
    %20 = arith.mulf %19, %7 : vector<3x16x16xf32>
    %21 = arith.subf %4, %20 : vector<3x16x16xf32>
    %cst_11 = arith.constant 0.000000e+00 : f32
    %22 = vector.broadcast %cst_11 : f32 to vector<1x16x16xf32>
    %23 = arith.cmpf oge, %10, %22 : vector<1x16x16xf32>
    %24 = vector.shape_cast %23 : vector<1x16x16xi1> to vector<1x16x16xi1>
    %25 = vector.broadcast %24 : vector<1x16x16xi1> to vector<3x16x16xi1>
    %26 = arith.select %25, %4, %21 : vector<3x16x16xi1>, vector<3x16x16xf32>
    %c0_12 = arith.constant 0 : index
    %c0_13 = arith.constant 0 : index
    %c0_14 = arith.constant 0 : index
    %27 = vector.load %arg4[%c0_12, %c0_13, %c0_14] : memref<3x16x16xf32, #tpu.memory_space<vmem>>, vector<3x16x16xf32>
    tpu.vector_store %arg4[%c0_12, %c0_13, %c0_14], %26 {strides = array<i32>} : memref<3x16x16xf32, #tpu.memory_space<vmem>>, vector<3x16x16xf32>,
    return
  }
  func.func @transform_0(%arg0: i32) -> (i32, i32, i32) {
    %c0_i32 = arith.constant 0 : i32
    %c0_i32_0 = arith.constant 0 : i32
    %c0_i32_1 = arith.constant 0 : i32
    return %c0_i32, %arg0, %c0_i32_0 : i32, i32, i32
  }
  func.func @transform_1(%arg0: i32) -> (i32, i32) {
    %c0_i32 = arith.constant 0 : i32
    %c0_i32_0 = arith.constant 0 : i32
    %c0_i32_1 = arith.constant 0 : i32
    return %c0_i32, %c0_i32_0 : i32, i32
  }
  func.func @transform_2(%arg0: i32) -> (i32, i32) {
    %c0_i32 = arith.constant 0 : i32
    %c0_i32_0 = arith.constant 0 : i32
    %c0_i32_1 = arith.constant 0 : i32
    return %c0_i32, %c0_i32_0 : i32, i32
  }
  func.func @transform_3(%arg0: i32) -> (i32, i32, i32) {
    %c0_i32 = arith.constant 0 : i32
    %c0_i32_0 = arith.constant 0 : i32
    %c0_i32_1 = arith.constant 0 : i32
    return %c0_i32, %arg0, %c0_i32_0 : i32, i32, i32
  }
}

</mosaic_0001>

<llo_original>
// kernel: tpu_custom_call.1
$region0: #{tpu_custom_call.1}
  #allocation0 [shape = 'u32[]', space=smem, size = 0x4, offset = 0x4, fixed_abs, tag = 'smem constant byte address 0x4 - core index']
  #allocation1 [shape = 'u32[72,128]{1,0:T(1,128)}', space=vmem, size = 0x9000, scoped, tag = 'internal scratch']
  %s0 = inlined_call_operand.vmem [shape: f32[3,16,8], index: 0, kind: input, shape index: {}]
  %s1 = inlined_call_operand.vmem [shape: f32[8,16], index: 1, kind: input, shape index: {}]
  %s2 = inlined_call_operand.vmem [shape: f32[8,16], index: 2, kind: input, shape index: {}]
  %s3 = inlined_call_operand.hbm [shape: f32[3,16,16], index: 3, kind: output, shape index: {}]
  %s4 = sld [smem:[#allocation0]]
  $region22: #{tpu_custom_call.1} parent=0
    _
  %s6 = ssub.s32 1, %s4
  %s7 = scalar_select 0, %s6, %s4
  $region1: #{tpu_custom_call.1} parent=0
    #allocation2 [shape = 'u8[24576]{0}', space=vmem, size = 0x6000, scoped, tag = 'output window, operand 0, single buffered']
    #allocation3 [shape = 's32[1]{0}', space=sflag, size = 0x4, scoped, tag = 'scoped memory for tpu_custom_call.1']
    %8 = vsyncpa [#allocation3], 0
    // Predicated region
    $region2: #{tpu_custom_call.1} parent=1 // pred_check
      _
    $region3: #{tpu_custom_call.1} parent=1 // pred_check_branch
      %10 = sbr.rel (0) target = $region5
    $region4: #{tpu_custom_call.1} parent=1 // pred_region
      _
    $region5: #{tpu_custom_call.1} parent=1 // pred_fallthru
      _
    // Predicated region
    $region6: #{tpu_custom_call.1} parent=1 // pred_check
      _
    $region7: #{tpu_custom_call.1} parent=1 // pred_check_branch
      %12 = sbr.rel (0) target = $region9
    $region8: #{tpu_custom_call.1} parent=1 // pred_region
      _
    $region9: #{tpu_custom_call.1} parent=1 // pred_fallthru
      _
    // Predicated region
    $region10: #{tpu_custom_call.1} parent=1 // pred_check
      _
    $region11: #{tpu_custom_call.1} parent=1 // pred_check_branch
      %14 = sbr.rel (0) target = $region13
    $region12: #{tpu_custom_call.1} parent=1 // pred_region
      _
    $region13: #{tpu_custom_call.1} parent=1 // pred_fallthru
      _
    %v15 = vld [vmem:[%s0] sm:$0xff]
    %v16 = vld [vmem:[%s0 + $0x8] sm:$0xff]
    %v17 = vld [vmem:[%s0 + $0x10] sm:$0xff]
    %v18 = vld [vmem:[%s0 + $0x18] sm:$0xff]
    %v19 = vld [vmem:[%s0 + $0x20] sm:$0xff]
    %v20 = vld [vmem:[%s0 + $0x28] sm:$0xff]
    %v21 = vld [vmem:[%s1] sm:$0xff]
    %vm22 = vcmask 64512
    %v24 = vsel %vm22, %v15, 0
    %v27 = vsel %vm22, %v16, 0
    %v30 = vsel %vm22, %v17, 0
    %v33 = vsel %vm22, %v18, 0
    %v36 = vsel %vm22, %v19, 0
    %v39 = vsel %vm22, %v20, 0
    %41 = vmatpush.msra.mxu0 0.0
    %42 = vmatpush.msra.mxu0 0.0
    %43 = vmatpush.msra.mxu0 0.0
    %44 = vmatpush.msra.mxu0 0.0
    %45 = vmatpush.msra.mxu0 0.0
    %46 = vmatpush.msra.mxu0 0.0
    %47 = vmatpush.msra.mxu0 0.0
    %48 = vmatpush.msra.mxu0 0.0
    %49 = vmatpush.msra.mxu0 0.0
    %50 = vmatpush.msra.mxu0 0.0
    %51 = vmatpush.msra.mxu0 0.0
    %52 = vmatpush.msra.mxu0 0.0
    %53 = vmatpush.msra.mxu0 0.0
    %54 = vmatpush.msra.mxu0 0.0
    %55 = vmatpush.msra.mxu0 0.0
    %56 = vmatpush.msra.mxu0 %v21
    %57 = vmatmul.f32.gmra.mxu0 %v24
    %v58 = vpop.f32.mrf.mxu0
    %v59 = vadd.f32 0.0, %v58
    %60 = vmatmul.f32.gmra.mxu0 %v27
    %v61 = vpop.f32.mrf.mxu0
    %v62 = vadd.f32 0.0, %v61
    %63 = vmatmul.f32.gmra.mxu0 %v30
    %v64 = vpop.f32.mrf.mxu0
    %v65 = vadd.f32 0.0, %v64
    %66 = vmatmul.f32.gmra.mxu0 %v33
    %v67 = vpop.f32.mrf.mxu0
    %v68 = vadd.f32 0.0, %v67
    %69 = vmatmul.f32.gmra.mxu0 %v36
    %v70 = vpop.f32.mrf.mxu0
    %v71 = vadd.f32 0.0, %v70
    %72 = vmatmul.f32.gmra.mxu0 %v39
    %v73 = vpop.f32.mrf.mxu0
    %v74 = vadd.f32 0.0, %v73
    %75 = vdwg.mxu0
    %v76 = vld [vmem:[%s2] sm:$0xff]
    %77 = vmatpush.msra.mxu0 0.0
    %78 = vmatpush.msra.mxu0 0.0
    %79 = vmatpush.msra.mxu0 0.0
    %80 = vmatpush.msra.mxu0 0.0
    %81 = vmatpush.msra.mxu0 0.0
    %82 = vmatpush.msra.mxu0 0.0
    %83 = vmatpush.msra.mxu0 0.0
    %84 = vmatpush.msra.mxu0 0.0
    %85 = vmatpush.msra.mxu0 0.0
    %86 = vmatpush.msra.mxu0 0.0
    %87 = vmatpush.msra.mxu0 0.0
    %88 = vmatpush.msra.mxu0 0.0
    %89 = vmatpush.msra.mxu0 0.0
    %90 = vmatpush.msra.mxu0 0.0
    %91 = vmatpush.msra.mxu0 0.0
    %92 = vmatpush.msra.mxu0 %v76
    %93 = vmatmul.f32.gmra.mxu0 %v24
    %v94 = vpop.f32.mrf.mxu0
    %v95 = vadd.f32 0.0, %v94
    %96 = vmatmul.f32.gmra.mxu0 %v27
    %v97 = vpop.f32.mrf.mxu0
    %v98 = vadd.f32 0.0, %v97
    %99 = vmatmul.f32.gmra.mxu0 %v30
    %v100 = vpop.f32.mrf.mxu0
    %v101 = vadd.f32 0.0, %v100
    %102 = vmatmul.f32.gmra.mxu0 %v33
    %v103 = vpop.f32.mrf.mxu0
    %v104 = vadd.f32 0.0, %v103
    %105 = vmatmul.f32.gmra.mxu0 %v36
    %v106 = vpop.f32.mrf.mxu0
    %v107 = vadd.f32 0.0, %v106
    %108 = vmatmul.f32.gmra.mxu0 %v39
    %v109 = vpop.f32.mrf.mxu0
    %v110 = vadd.f32 0.0, %v109
    %111 = vdwg.mxu0
    %v112 = vmul.f32 %v59, %v95
    %v113 = vmul.f32 %v62, %v98
    %v114 = vmul.f32 %v65, %v101
    %v115 = vmul.f32 %v68, %v104
    %v116 = vmul.f32 %v71, %v107
    %v117 = vmul.f32 %v74, %v110
    %vm118 = vcmask 130048
    %v119 = vsel %vm118, %v112, 0.0
    %v120 = vsel %vm118, %v114, 0.0
    %v121 = vadd.f32 %v119, %v120
    %v122 = vsel %vm118, %v116, 0.0
    %v123 = vadd.f32 %v121, %v122
    %v124 = vsel %vm118, %v113, 0.0
    %v125 = vsel %vm118, %v115, 0.0
    %v126 = vadd.f32 %v124, %v125
    %v127 = vsel %vm118, %v117, 0.0
    %v128 = vadd.f32 %v126, %v127
    %v129 = vmul.f32 %v95, %v95
    %v130 = vmul.f32 %v98, %v98
    %v131 = vmul.f32 %v101, %v101
    %v132 = vmul.f32 %v104, %v104
    %v133 = vmul.f32 %v107, %v107
    %v134 = vmul.f32 %v110, %v110
    %v135 = vsel %vm118, %v129, 0.0
    %v136 = vsel %vm118, %v131, 0.0
    %v137 = vadd.f32 %v135, %v136
    %v138 = vsel %vm118, %v133, 0.0
    %v139 = vadd.f32 %v137, %v138
    %v140 = vsel %vm118, %v130, 0.0
    %v141 = vsel %vm118, %v132, 0.0
    %v142 = vadd.f32 %v140, %v141
    %v143 = vsel %vm118, %v134, 0.0
    %v144 = vadd.f32 %v142, %v143
    %v145 = vadd.f32 %v139, 1e-07
    %v146 = vadd.f32 %v144, 1e-07
    %v147 = vrcp.pop %v145
    %v148 = vmul.f32 %v145, %v147
    %v149 = vsub.f32 1.0, %v148
    %v150 = vmul.f32 %v147, %v149
    %v151 = vadd.f32 %v147, %v150
    %vm152 = vweird.f32 %v145
    %vm153 = vweird.f32 %v147
    %vm154 = vmor %vm152, %vm153
    %v155 = vsel %vm154, %v147, %v151
    %v156 = vand.u32 2147483647, %v145
    %vm157 = vcmp.eq.f32.partialorder %v156, 8.507059e+37
    %v158 = vand.u32 %v145, 2147483648
    %v159 = vor.u32 1.1754944e-38, %v158
    %v160 = vsel %vm157, %v159, %v155
    %v161 = vmul.f32 1.0, %v160
    %v162 = vrcp.pop %v146
    %v163 = vmul.f32 %v146, %v162
    %v164 = vsub.f32 1.0, %v163
    %v165 = vmul.f32 %v162, %v164
    %v166 = vadd.f32 %v162, %v165
    %vm167 = vweird.f32 %v146
    %vm168 = vweird.f32 %v162
    %vm169 = vmor %vm167, %vm168
    %v170 = vsel %vm169, %v162, %v166
    %v171 = vand.u32 2147483647, %v146
    %vm172 = vcmp.eq.f32.partialorder %v171, 8.507059e+37
    %v173 = vand.u32 %v146, 2147483648
    %v174 = vor.u32 1.1754944e-38, %v173
    %v175 = vsel %vm172, %v174, %v170
    %v176 = vmul.f32 1.0, %v175
    %v177 = vmul.f32 %v123, %v161
    %v178 = vmul.f32 %v128, %v176
    %v179 = vmul.f32 %v177, %v95
    %v180 = vmul.f32 %v178, %v98
    %v181 = vmul.f32 %v177, %v101
    %v182 = vmul.f32 %v178, %v104
    %v183 = vmul.f32 %v177, %v107
    %v184 = vmul.f32 %v178, %v110
    %v185 = vsub.f32 %v59, %v179
    %v186 = vsub.f32 %v62, %v180
    %v187 = vsub.f32 %v65, %v181
    %v188 = vsub.f32 %v68, %v182
    %v189 = vsub.f32 %v71, %v183
    %v190 = vsub.f32 %v74, %v184
    %vm191 = vcmp.ge.f32.partialorder %v123, 0.0
    %vm192 = vcmp.ge.f32.partialorder %v128, 0.0
    %v193 = vsel %vm191, 1, 0
    %v194 = vsel %vm192, 1, 0
    %vm195 = vcmp.eq.s32.totalorder %v193, 1
    %vm196 = vcmp.eq.s32.totalorder %v194, 1
    %v197 = vsel %vm195, %v59, %v185
    %v198 = vsel %vm196, %v62, %v186
    %v199 = vsel %vm195, %v65, %v187
    %v200 = vsel %vm196, %v68, %v188
    %v201 = vsel %vm195, %v71, %v189
    %v202 = vsel %vm196, %v74, %v190
    %203 = vst.msk [vmem:[#allocation2] sm:$0xff] %vm118, %v197
    %204 = vst.msk [vmem:[#allocation2 + $0x8] sm:$0xff] %vm118, %v198
    %205 = vst.msk [vmem:[#allocation2 + $0x10] sm:$0xff] %vm118, %v199
    %206 = vst.msk [vmem:[#allocation2 + $0x18] sm:$0xff] %vm118, %v200
    %207 = vst.msk [vmem:[#allocation2 + $0x20] sm:$0xff] %vm118, %v201
    %208 = vst.msk [vmem:[#allocation2 + $0x28] sm:$0xff] %vm118, %v202
    // Predicated region
    $region14: #{tpu_custom_call.1} parent=1 // pred_check
      _
    $region15: #{tpu_custom_call.1} parent=1 // pred_check_branch
      %210 = sbr.rel (0) target = $region17
    $region16: #{tpu_custom_call.1} parent=1 // pred_region
      %212 = vsyncadd [#allocation3], 0
      %s213 = sshll.u32 [#allocation2], 4
      %s214 = int_to_ptr.vmem [resolvable:$true] %s213
      %s215 = sshll.u32 %s3, 4
      %s216 = int_to_ptr.hbm [resolvable:$true] %s215
      %221 = dma.vmem_to_hbm [thread:$0]  %s214, 768, %s216, [#allocation3], 128, 128, 8
    $region17: #{tpu_custom_call.1} parent=1 // pred_fallthru
      _
    // Predicated region
    $region18: #{tpu_custom_call.1} parent=1 // pred_check
      _
    $region19: #{tpu_custom_call.1} parent=1 // pred_check_branch
      %223 = sbr.rel (0) target = $region21
    $region20: #{tpu_custom_call.1} parent=1 // pred_region
      %225 = dma.done [#allocation3], 768
    $region21: #{tpu_custom_call.1} parent=1 // pred_fallthru
      _
    %226 = vsyncpa [#allocation3], 1

</llo_original>
